<compile_context>
chip_gen: v7x
topology: tpu7x:2x2x1
jax: 0.10.0
libtpu: 0.0.40
codegen_flags: <defaults>
</compile_context>

<pallas_src>
import functools

import jax
import jax.numpy as jnp
from jax import lax
from jax.experimental import pallas as pl
from jax.experimental.pallas import tpu as pltpu


# ----------------------------------------------------------------------------
# In-kernel helpers (only ops with guaranteed Mosaic lowerings)
# ----------------------------------------------------------------------------
def _erf_approx(x):
    """Abramowitz & Stegun 7.1.26, |abs err| < 1.5e-7 (matches exact erf to f32
    working precision) -- avoids relying on a lax.erf lowering."""
    a1, a2, a3, a4, a5 = (0.254829592, -0.284496736, 1.421413741,
                          -1.453152027, 1.061405429)
    p = 0.3275911
    ax = jnp.abs(x)
    t = 1.0 / (1.0 + p * ax)
    poly = ((((a5 * t + a4) * t + a3) * t + a2) * t + a1) * t
    e = 1.0 - poly * jnp.exp(-(ax * ax))
    return jnp.where(x >= 0, e, -e)


def _gelu_exact(x):
    """PyTorch nn.GELU default (exact erf)."""
    return 0.5 * x * (1.0 + _erf_approx(x * 0.7071067811865476))


# ----------------------------------------------------------------------------
# Pallas kernel: fused EDM-combine + GCM-gate + concat + (BN->)Conv1x1 -> GELU
#                -> Conv1x1(->BN), channels-first / lane-dense (pixels on lanes).
# ----------------------------------------------------------------------------
def _epfm_mlp_kernel(x_ref, ps_ref, att_ref, w1_ref, b1_ref, w2_ref, b2_ref,
                     o_ref, *, cin, edm_scale):
    # Block shapes:
    #   x/ps : (1, C, TP)   att : (1, C, 1)
    #   w1   : (Cout, 2C)   b1/b2 : (Cout, 1)   w2 : (Cout, Cout)
    #   o    : (1, Cout, TP)
    x = x_ref[0].astype(jnp.float32)        # (C, TP)   activations arrive bf16/f32
    ps = ps_ref[0].astype(jnp.float32)      # (C, TP)   sum of avg pools
    att = att_ref[0].astype(jnp.float32)    # (C, 1)    GCM gate for this batch idx

    xe = edm_scale * x - ps                 # fused EDM combine (VPU)
    xg = x * att                            # fused GCM gating  (VPU)

    # Conv2d(2C -> Cout, 1x1) with BN1 folded in; concat fused.
    if 2 * cin <= 8:
        # small C: fill 8 sublanes and use a single K=2C dot
        xc = jnp.concatenate([xe, xg], axis=0)                      # (2C, TP)
        h = jnp.dot(w1_ref[...], xc, preferred_element_type=jnp.float32)
    else:
        h = (jnp.dot(w1_ref[:, :cin], xe, preferred_element_type=jnp.float32)
             + jnp.dot(w1_ref[:, cin:], xg, preferred_element_type=jnp.float32))
    h = h + b1_ref[...]

    h = _gelu_exact(h)                      # exact-erf GELU (nn.GELU default)

    # Conv2d(Cout -> Cout, 1x1) with BN2 folded in.
    y = jnp.dot(w2_ref[...], h, preferred_element_type=jnp.float32) + b2_ref[...]

    o_ref[0] = y.astype(o_ref.dtype)        # lane-dense store


def _pick_pixel_tile(hw, n_batch, per_px_bytes, *, target_bytes=2 << 20,
                     vmem_ws_bytes=16 << 20):
    """Byte-budget-driven pixel tile (multiple of 128).

    target_bytes  : ~HBM bytes (in + out) per grid step so the ~0.35us/step
                    pipeline overhead is amortized on all generations.
    vmem_ws_bytes : cap on the double-buffered activation working set
                    (v7x has only 64 MiB VMEM / 32 MiB scoped default).
    """
    if hw < 128:
        return hw                                       # full extent (legal block)
    hw_pad = -(-hw // 128) * 128                        # ceil to 128 multiple
    tp = max(target_bytes // per_px_bytes, 128)
    tp = min(tp, max(vmem_ws_bytes // (2 * per_px_bytes), 128))
    tp = max(128, (tp // 128) * 128)
    tp = min(tp, hw_pad)
    if n_batch == 1 and hw_pad >= 256:
        # guarantee >= 2 pixel blocks so both TensorCores (v7x) are fed
        tp = min(tp, max(128, (hw_pad // 2 // 128) * 128))
    return tp


def fused_epfm_mlp(x, pool_sum, att, w1t, b1, w2t, b2, *, edm_scale,
                   act_out_dtype=jnp.bfloat16, target_bytes=2 << 20):
    """x, pool_sum: (N, C, H, W); att: (N, C); weights pre-folded / transposed:
         w1t: (Cout, 2C)   b1: (Cout,)   w2t: (Cout, Cout)   b2: (Cout,)
    Returns (N, Cout, H, W) in act_out_dtype."""
    N, C, H, W = x.shape
    Cout = w1t.shape[0]
    HW = H * W

    xr = x.reshape(N, C, HW)                 # reshape only — no transpose / pad
    psr = pool_sum.reshape(N, C, HW)
    attr = att.reshape(N, C, 1).astype(jnp.float32)

    per_px = (C * xr.dtype.itemsize + C * psr.dtype.itemsize
              + Cout * jnp.dtype(act_out_dtype).itemsize)
    tp = _pick_pixel_tile(HW, N, per_px, target_bytes=target_bytes)
    grid = (N, pl.cdiv(HW, tp))              # tail block (if any) is masked

    const = lambda shape: pl.BlockSpec(shape, lambda n, p: (0, 0))
    kernel = functools.partial(_epfm_mlp_kernel, cin=C, edm_scale=float(edm_scale))

    out = pl.pallas_call(
        kernel,
        out_shape=jax.ShapeDtypeStruct((N, Cout, HW), act_out_dtype),
        grid_spec=pltpu.PrefetchScalarGridSpec(
            num_scalar_prefetch=0,
            grid=grid,
            in_specs=[
                pl.BlockSpec((1, C, tp), lambda n, p: (n, 0, p)),   # x tile
                pl.BlockSpec((1, C, tp), lambda n, p: (n, 0, p)),   # pool_sum tile
                pl.BlockSpec((1, C, 1), lambda n, p: (n, 0, 0)),    # GCM gate (per-batch)
                const((Cout, 2 * C)),                               # W1 (BN1-folded)
                const((Cout, 1)),                                   # b1 (folded)
                const((Cout, Cout)),                                # W2 (BN2-folded)
                const((Cout, 1)),                                   # b2 (folded)
            ],
            out_specs=pl.BlockSpec((1, Cout, tp), lambda n, p: (n, 0, p)),
        ),
        compiler_params=pltpu.CompilerParams(
            dimension_semantics=("parallel", "parallel"),
            vmem_limit_bytes=32 * 1024 * 1024),
    )(xr, psr, attr,
      w1t.astype(jnp.float32), b1.reshape(Cout, 1).astype(jnp.float32),
      w2t.astype(jnp.float32), b2.reshape(Cout, 1).astype(jnp.float32))

    return out.reshape(N, Cout, H, W)


# ----------------------------------------------------------------------------
# Plain-JAX glue (only the truly spatial pieces stay outside the kernel)
# ----------------------------------------------------------------------------
def _avg_pool_sum(x, kernel_list):
    """sum_k AvgPool2d(k, stride=1, padding=k//2, count_include_pad=True)(x)."""
    # TODO(synk): the k x k avg pools span rows of the flattened pixel axis and
    #             are left to XLA; only their combine is fused into the kernel.
    total = jnp.zeros_like(x)
    for k in kernel_list:
        assert k % 2 == 1, "kernel_list entries must be odd (symmetric padding)"
        p = k // 2
        s = lax.reduce_window(x, 0.0, lax.add, (1, 1, k, k), (1, 1, 1, 1),
                              padding=((0, 0), (0, 0), (p, p), (p, p)))
        total = total + s / float(k * k)
    return total


def _bilinear_matrix(n_in, n_out):
    if n_in == 1:
        return jnp.ones((n_out, 1), jnp.float32)
    pos = jnp.arange(n_out, dtype=jnp.float32) * (n_in - 1) / (n_out - 1)
    lo = jnp.clip(jnp.floor(pos).astype(jnp.int32), 0, n_in - 2)
    frac = pos - lo.astype(jnp.float32)
    return (jax.nn.one_hot(lo, n_in, dtype=jnp.float32) * (1.0 - frac)[:, None]
            + jax.nn.one_hot(lo + 1, n_in, dtype=jnp.float32) * frac[:, None])


def upsample_bilinear_x2_align_corners(x):
    """nn.Upsample(scale_factor=2, mode='bilinear', align_corners=True), NCHW,
    expressed as two small dense interpolation matmuls (no gathers)."""
    # TODO(synk): could be fused as a (1, Cout, 4*tp) kernel epilogue; left to XLA.
    N, C, H, W = x.shape
    ah = _bilinear_matrix(H, 2 * H)
    aw = _bilinear_matrix(W, 2 * W)
    y = jnp.einsum("oh,nchw->ncow", ah, x.astype(jnp.float32))
    return jnp.einsum("pw,ncow->ncop", aw, y)


def maxpool_2x2(x):
    x = x.astype(jnp.float32)
    return lax.reduce_window(x, -jnp.inf, lax.max, (1, 1, 2, 2), (1, 1, 2, 2),
                             padding="VALID")


# ----------------------------------------------------------------------------
# Parameters (deterministic) and full EPFM forward
# ----------------------------------------------------------------------------
def make_epfm_params(key, in_channels, out_channels, eps=1e-5):
    C, Co = in_channels, out_channels
    ks = jax.random.split(key, 10)
    p = {}
    # GCM gating (TODO(synk): synthetic, see header)
    p["gcm_w"] = 0.1 * jax.random.normal(ks[0], (C, C), jnp.float32)
    p["gcm_b"] = 0.05 * jax.random.normal(ks[1], (C,), jnp.float32)
    # BatchNorm2d(2C): running stats (mean=0, var=1 at init) folded to affine
    g1 = 1.0 + 0.1 * jax.random.normal(ks[2], (2 * C,), jnp.float32)
    b1 = 0.05 * jax.random.normal(ks[3], (2 * C,), jnp.float32)
    p["bn1_scale"] = g1 / jnp.sqrt(1.0 + eps)
    p["bn1_shift"] = b1
    # Conv2d(2C -> Co, 1x1): torch weight (Co, 2C, 1, 1) -> matmul form (2C, Co)
    p["w1"] = 0.1 * jax.random.normal(ks[4], (2 * C, Co), jnp.float32)
    p["b1"] = 0.05 * jax.random.normal(ks[5], (Co,), jnp.float32)
    # Conv2d(Co -> Co, 1x1)
    p["w2"] = 0.1 * jax.random.normal(ks[6], (Co, Co), jnp.float32)
    p["b2"] = 0.05 * jax.random.normal(ks[7], (Co,), jnp.float32)
    # BatchNorm2d(Co)
    g2 = 1.0 + 0.1 * jax.random.normal(ks[8], (Co,), jnp.float32)
    b2 = 0.05 * jax.random.normal(ks[9], (Co,), jnp.float32)
    p["bn2_scale"] = g2 / jnp.sqrt(1.0 + eps)
    p["bn2_shift"] = b2
    return p


def _fold_mlp_weights(params):
    """Fold BN1/BN2 (inference running-stat affine) into the 1x1 convs and
    transpose to the channels-first form the Pallas kernel consumes."""
    s1, t1 = params["bn1_scale"], params["bn1_shift"]
    s2, t2 = params["bn2_scale"], params["bn2_shift"]
    w1, b1 = params["w1"], params["b1"]          # (2C, Co), (Co,)
    w2, b2 = params["w2"], params["b2"]          # (Co, Co), (Co,)
    w1f = s1[:, None] * w1                       # BN1 folded into conv1
    b1f = t1 @ w1 + b1
    w2f = w2 * s2[None, :]                       # BN2 folded into conv2
    b2f = b2 * s2 + t2
    return w1f.T, b1f, w2f.T, b2f                # (Co,2C), (Co,), (Co,Co), (Co,)


@functools.partial(jax.jit, static_argnames=("sample", "up", "kernel_list"))
def epfm_forward(x, params, *, sample=True, up=True, kernel_list=(3, 9)):
    """x: (N, C, H, W), NCHW as in PyTorch (inference mode)."""
    act_dtype = jnp.bfloat16   # halves HBM traffic for the mem-bound fused kernel

    # Only the spatial avg-pools and the tiny GCM gate stay in XLA.  pool_sum is
    # emitted directly in bf16 (the cast fuses with the reduce); x is fed in its
    # native dtype (an explicit cast would add an extra HBM pass).
    pool_sum = _avg_pool_sum(x, kernel_list).astype(act_dtype)
    att = jax.nn.sigmoid(jnp.mean(x, axis=(2, 3)) @ params["gcm_w"]
                         + params["gcm_b"])                       # (N, C)

    w1t, b1f, w2t, b2f = _fold_mlp_weights(params)

    # EDM combine + GCM gating + concat + BN + 1x1 convs + GELU, all fused.
    y = fused_epfm_mlp(x, pool_sum, att, w1t, b1f, w2t, b2f,
                       edm_scale=1.0 + len(kernel_list),
                       act_out_dtype=act_dtype)                   # (N, Cout, H, W)

    if sample:
        y = upsample_bilinear_x2_align_corners(y) if up else maxpool_2x2(y)
    return y.astype(x.dtype)


# ----------------------------------------------------------------------------
if __name__ == "__main__":
    in_channels, out_channels = 4, 8
    N, H, W = 2, 16, 16

    key = jax.random.PRNGKey(0)
    kx, kp = jax.random.split(key)
    x = jax.random.normal(kx, (N, in_channels, H, W), jnp.float32)
    params = make_epfm_params(kp, in_channels, out_channels)

    y = epfm_forward(x, params, sample=True, up=True, kernel_list=(3, 9))
    y = jax.block_until_ready(y)

    assert y.shape == (N, out_channels, 2 * H, 2 * W), y.shape
    assert bool(jnp.all(jnp.isfinite(y)))
    print("KERNEL_OK")
</pallas_src>

<mosaic_0001>
module attributes {stable_mosaic.version = 11 : i64} {
  func.func @_epfm_mlp_kernel(%arg0: i32, %arg1: i32, %arg2: memref<1x4x256xf32, #tpu.memory_space<vmem>>, %arg3: memref<1x4x256xbf16, #tpu.memory_space<vmem>>, %arg4: memref<1x4x1xf32, #tpu.memory_space<vmem>>, %arg5: memref<8x8xf32, #tpu.memory_space<vmem>>, %arg6: memref<8x1xf32, #tpu.memory_space<vmem>>, %arg7: memref<8x8xf32, #tpu.memory_space<vmem>>, %arg8: memref<8x1xf32, #tpu.memory_space<vmem>>, %arg9: memref<1x8x256xbf16, #tpu.memory_space<vmem>>) attributes {dimension_semantics = [#tpu.dimension_semantics<parallel>, #tpu.dimension_semantics<parallel>], iteration_bounds = array<i64: 2, 1>, scalar_prefetch = 0 : i64, scratch_operands = 0 : i64, tpu.core_type = #tpu.core_type<tc>, window_params = [{transform_indices = @transform_0, window_bounds = array<i64: 1, 4, 256>}, {transform_indices = @transform_1, window_bounds = array<i64: 1, 4, 256>}, {transform_indices = @transform_2, window_bounds = array<i64: 1, 4, 1>}, {pipeline_mode = #tpu.pipeline_mode<synchronous>, transform_indices = @transform_3, window_bounds = array<i64: 8, 8>}, {pipeline_mode = #tpu.pipeline_mode<synchronous>, transform_indices = @transform_4, window_bounds = array<i64: 8, 1>}, {pipeline_mode = #tpu.pipeline_mode<synchronous>, transform_indices = @transform_5, window_bounds = array<i64: 8, 8>}, {pipeline_mode = #tpu.pipeline_mode<synchronous>, transform_indices = @transform_6, window_bounds = array<i64: 8, 1>}, {transform_indices = @transform_7, window_bounds = array<i64: 1, 8, 256>}]} {
    %c0 = arith.constant 0 : index
    %c0_0 = arith.constant 0 : index
    %c0_1 = arith.constant 0 : index
    %0 = vector.load %arg2[%c0, %c0_0, %c0_1] : memref<1x4x256xf32, #tpu.memory_space<vmem>>, vector<1x4x256xf32>
    %1 = vector.shape_cast %0 : vector<1x4x256xf32> to vector<4x256xf32>
    %c0_2 = arith.constant 0 : index
    %c0_3 = arith.constant 0 : index
    %c0_4 = arith.constant 0 : index
    %2 = vector.load %arg3[%c0_2, %c0_3, %c0_4] : memref<1x4x256xbf16, #tpu.memory_space<vmem>>, vector<1x4x256xbf16>
    %3 = vector.shape_cast %2 : vector<1x4x256xbf16> to vector<4x256xbf16>
    %4 = arith.extf %3 : vector<4x256xbf16> to vector<4x256xf32>
    %c0_5 = arith.constant 0 : index
    %c0_6 = arith.constant 0 : index
    %c0_7 = arith.constant 0 : index
    %5 = vector.load %arg4[%c0_5, %c0_6, %c0_7] : memref<1x4x1xf32, #tpu.memory_space<vmem>>, vector<1x4x1xf32>
    %6 = vector.shape_cast %5 : vector<1x4x1xf32> to vector<4x1xf32>
    %cst = arith.constant 3.000000e+00 : f32
    %7 = vector.broadcast %cst : f32 to vector<4x256xf32>
    %8 = arith.mulf %7, %1 : vector<4x256xf32>
    %9 = arith.subf %8, %4 : vector<4x256xf32>
    %10 = vector.broadcast %6 : vector<4x1xf32> to vector<4x256xf32>
    %11 = arith.mulf %1, %10 : vector<4x256xf32>
    %12 = tpu.concatenate %9, %11 in 0 : vector<4x256xf32>, vector<4x256xf32> -> vector<8x256xf32>
    %c0_8 = arith.constant 0 : index
    %c0_9 = arith.constant 0 : index
    %13 = vector.load %arg5[%c0_8, %c0_9] : memref<8x8xf32, #tpu.memory_space<vmem>>, vector<8x8xf32>
    %cst_10 = arith.constant dense<0.000000e+00> : vector<8x256xf32>
    %14 = tpu.matmul %13, %12, %cst_10 {dimension_numbers = #tpu.dot_dimension_numbers<[1], [0], [0], [1], [0, 0, 1, 1], [], []>} : vector<8x8xf32>, vector<8x256xf32>, vector<8x256xf32> -> vector<8x256xf32>
    %c0_11 = arith.constant 0 : index
    %c0_12 = arith.constant 0 : index
    %15 = vector.load %arg6[%c0_11, %c0_12] : memref<8x1xf32, #tpu.memory_space<vmem>>, vector<8x1xf32>
    %16 = vector.broadcast %15 : vector<8x1xf32> to vector<8x256xf32>
    %17 = arith.addf %14, %16 : vector<8x256xf32>
    %cst_13 = arith.constant 5.000000e-01 : f32
    %18 = vector.broadcast %cst_13 : f32 to vector<8x256xf32>
    %19 = arith.mulf %18, %17 : vector<8x256xf32>
    %cst_14 = arith.constant 0.707106769 : f32
    %20 = vector.broadcast %cst_14 : f32 to vector<8x256xf32>
    %21 = arith.mulf %17, %20 : vector<8x256xf32>
    %22 = math.absf %21 : vector<8x256xf32>
    %cst_15 = arith.constant 0.327591091 : f32
    %23 = vector.broadcast %cst_15 : f32 to vector<8x256xf32>
    %24 = arith.mulf %23, %22 : vector<8x256xf32>
    %cst_16 = arith.constant 1.000000e+00 : f32
    %25 = vector.broadcast %cst_16 : f32 to vector<8x256xf32>
    %26 = arith.addf %25, %24 : vector<8x256xf32>
    %cst_17 = arith.constant 1.000000e+00 : f32
    %27 = vector.broadcast %cst_17 : f32 to vector<8x256xf32>
    %28 = arith.divf %27, %26 : vector<8x256xf32>
    %cst_18 = arith.constant 1.06140542 : f32
    %29 = vector.broadcast %cst_18 : f32 to vector<8x256xf32>
    %30 = arith.mulf %29, %28 : vector<8x256xf32>
    %cst_19 = arith.constant -1.45315206 : f32
    %31 = vector.broadcast %cst_19 : f32 to vector<8x256xf32>
    %32 = arith.addf %30, %31 : vector<8x256xf32>
    %33 = arith.mulf %32, %28 : vector<8x256xf32>
    %cst_20 = arith.constant 1.42141378 : f32
    %34 = vector.broadcast %cst_20 : f32 to vector<8x256xf32>
    %35 = arith.addf %33, %34 : vector<8x256xf32>
    %36 = arith.mulf %35, %28 : vector<8x256xf32>
    %cst_21 = arith.constant -0.284496725 : f32
    %37 = vector.broadcast %cst_21 : f32 to vector<8x256xf32>
    %38 = arith.addf %36, %37 : vector<8x256xf32>
    %39 = arith.mulf %38, %28 : vector<8x256xf32>
    %cst_22 = arith.constant 0.254829586 : f32
    %40 = vector.broadcast %cst_22 : f32 to vector<8x256xf32>
    %41 = arith.addf %39, %40 : vector<8x256xf32>
    %42 = arith.mulf %41, %28 : vector<8x256xf32>
    %43 = arith.mulf %22, %22 : vector<8x256xf32>
    %cst_23 = arith.constant 0.000000e+00 : f32
    %44 = vector.broadcast %cst_23 : f32 to vector<8x256xf32>
    %45 = arith.subf %44, %43 : vector<8x256xf32>
    %46 = math.exp %45 : vector<8x256xf32>
    %47 = arith.mulf %42, %46 : vector<8x256xf32>
    %cst_24 = arith.constant 1.000000e+00 : f32
    %48 = vector.broadcast %cst_24 : f32 to vector<8x256xf32>
    %49 = arith.subf %48, %47 : vector<8x256xf32>
    %cst_25 = arith.constant 0.000000e+00 : f32
    %50 = vector.broadcast %cst_25 : f32 to vector<8x256xf32>
    %51 = arith.cmpf oge, %21, %50 : vector<8x256xf32>
    %cst_26 = arith.constant 0.000000e+00 : f32
    %52 = vector.broadcast %cst_26 : f32 to vector<8x256xf32>
    %53 = arith.subf %52, %49 : vector<8x256xf32>
    %54 = arith.select %51, %49, %53 : vector<8x256xi1>, vector<8x256xf32>
    %cst_27 = arith.constant 1.000000e+00 : f32
    %55 = vector.broadcast %cst_27 : f32 to vector<8x256xf32>
    %56 = arith.addf %55, %54 : vector<8x256xf32>
    %57 = arith.mulf %19, %56 : vector<8x256xf32>
    %c0_28 = arith.constant 0 : index
    %c0_29 = arith.constant 0 : index
    %58 = vector.load %arg7[%c0_28, %c0_29] : memref<8x8xf32, #tpu.memory_space<vmem>>, vector<8x8xf32>
    %cst_30 = arith.constant dense<0.000000e+00> : vector<8x256xf32>
    %59 = tpu.matmul %58, %57, %cst_30 {dimension_numbers = #tpu.dot_dimension_numbers<[1], [0], [0], [1], [0, 0, 1, 1], [], []>} : vector<8x8xf32>, vector<8x256xf32>, vector<8x256xf32> -> vector<8x256xf32>
    %c0_31 = arith.constant 0 : index
    %c0_32 = arith.constant 0 : index
    %60 = vector.load %arg8[%c0_31, %c0_32] : memref<8x1xf32, #tpu.memory_space<vmem>>, vector<8x1xf32>
    %61 = vector.broadcast %60 : vector<8x1xf32> to vector<8x256xf32>
    %62 = arith.addf %59, %61 : vector<8x256xf32>
    %63 = arith.truncf %62 : vector<8x256xf32> to vector<8x256xbf16>
    %c0_33 = arith.constant 0 : index
    %c0_34 = arith.constant 0 : index
    %c0_35 = arith.constant 0 : index
    %64 = vector.load %arg9[%c0_33, %c0_34, %c0_35] : memref<1x8x256xbf16, #tpu.memory_space<vmem>>, vector<1x8x256xbf16>
    %65 = vector.shape_cast %64 : vector<1x8x256xbf16> to vector<8x256xbf16>
    %66 = vector.shape_cast %63 : vector<8x256xbf16> to vector<1x8x256xbf16>
    tpu.vector_store %arg9[%c0_33, %c0_34, %c0_35], %66 {strides = array<i32>} : memref<1x8x256xbf16, #tpu.memory_space<vmem>>, vector<1x8x256xbf16>,
    return
  }
  func.func @transform_0(%arg0: i32, %arg1: i32) -> (i32, i32, i32) {
    %c0_i32 = arith.constant 0 : i32
    %c0_i32_0 = arith.constant 0 : i32
    return %arg0, %c0_i32, %arg1 : i32, i32, i32
  }
  func.func @transform_1(%arg0: i32, %arg1: i32) -> (i32, i32, i32) {
    %c0_i32 = arith.constant 0 : i32
    %c0_i32_0 = arith.constant 0 : i32
    return %arg0, %c0_i32, %arg1 : i32, i32, i32
  }
  func.func @transform_2(%arg0: i32, %arg1: i32) -> (i32, i32, i32) {
    %c0_i32 = arith.constant 0 : i32
    %c0_i32_0 = arith.constant 0 : i32
    %c0_i32_1 = arith.constant 0 : i32
    return %arg0, %c0_i32, %c0_i32_0 : i32, i32, i32
  }
  func.func @transform_3(%arg0: i32, %arg1: i32) -> (i32, i32) {
    %c0_i32 = arith.constant 0 : i32
    %c0_i32_0 = arith.constant 0 : i32
    %c0_i32_1 = arith.constant 0 : i32
    return %c0_i32, %c0_i32_0 : i32, i32
  }
  func.func @transform_4(%arg0: i32, %arg1: i32) -> (i32, i32) {
    %c0_i32 = arith.constant 0 : i32
    %c0_i32_0 = arith.constant 0 : i32
    %c0_i32_1 = arith.constant 0 : i32
    return %c0_i32, %c0_i32_0 : i32, i32
  }
  func.func @transform_5(%arg0: i32, %arg1: i32) -> (i32, i32) {
    %c0_i32 = arith.constant 0 : i32
    %c0_i32_0 = arith.constant 0 : i32
    %c0_i32_1 = arith.constant 0 : i32
    return %c0_i32, %c0_i32_0 : i32, i32
  }
  func.func @transform_6(%arg0: i32, %arg1: i32) -> (i32, i32) {
    %c0_i32 = arith.constant 0 : i32
    %c0_i32_0 = arith.constant 0 : i32
    %c0_i32_1 = arith.constant 0 : i32
    return %c0_i32, %c0_i32_0 : i32, i32
  }
  func.func @transform_7(%arg0: i32, %arg1: i32) -> (i32, i32, i32) {
    %c0_i32 = arith.constant 0 : i32
    %c0_i32_0 = arith.constant 0 : i32
    return %arg0, %c0_i32, %arg1 : i32, i32, i32
  }
}

</mosaic_0001>

<llo_original>
// kernel: epfm_forward.1
$region0: #{epfm_forward.1}
  #allocation0 [shape = 'u32[]', space=smem, size = 0x4, offset = 0x4, fixed_abs, tag = 'smem constant byte address 0x4 - core index']
  #allocation1 [shape = 'u32[144,128]{1,0:T(1,128)}', space=vmem, size = 0x12000, scoped, tag = 'internal scratch']
  %s0 = inlined_call_operand.vmem [shape: f32[2,4,256], index: 0, kind: input, shape index: {}]
  %s1 = inlined_call_operand.vmem [shape: bf16[2,4,256], index: 1, kind: input, shape index: {}]
  %s2 = inlined_call_operand.vmem [shape: f32[2,4,1], index: 2, kind: input, shape index: {}]
  %s3 = inlined_call_operand.vmem [shape: f32[8,8], index: 3, kind: input, shape index: {}]
  %s4 = inlined_call_operand.vmem [shape: f32[8,1], index: 4, kind: input, shape index: {}]
  %s5 = inlined_call_operand.vmem [shape: f32[8,8], index: 5, kind: input, shape index: {}]
  %s6 = inlined_call_operand.vmem [shape: f32[8,1], index: 6, kind: input, shape index: {}]
  %s7 = inlined_call_operand.vmem [shape: bf16[2,8,256], index: 7, kind: output, shape index: {}]
  %s8 = sld [smem:[#allocation0]]
  $region61: #{epfm_forward.1} parent=0
    _
  %s10 = ssub.s32 1, %s8
  %s11 = scalar_select 0, %s10, %s8
  loop: start=0, step=1, limit=4
  $region2: #{epfm_forward.1} parent=0 // loop_pre_header
    _
  $region3: #{epfm_forward.1} parent=0 // loop_header
    %s13 = sphi 0, %s17
    %p14 = scmp.ge.s32.totalorder %s13, 4
    %s20 = sphi 0, %s32
    %s21 = sphi 0, %s28
    %s22 = sphi 0, %s20
    %s23 = sphi 0, %s21
    %s24 = sphi 0, %s22
    %s25 = sphi 0, %s23
    %s37 = sphi 0, %s39
    %s40 = sphi 0, %s37
    %s41 = sphi 0, %s40
    %s57 = sphi 0, %s41
    %s65 = sphi 0, %s67
    %s68 = sphi 0, %s65
    %s69 = sphi 0, %s68
    %s85 = sphi 0, %s69
    %s91 = sphi 0, %s93
    %s94 = sphi 0, %s91
    %s95 = sphi 0, %s94
    %s111 = sphi 0, %s95
    %s115 = sphi 0, %s115
    %s117 = sphi 0, %s115
    %s118 = sphi 0, %s117
    %s132 = sphi 0, %s118
    %s136 = sphi 0, %s136
    %s138 = sphi 0, %s136
    %s139 = sphi 0, %s138
    %s153 = sphi 0, %s139
    %s157 = sphi 0, %s157
    %s159 = sphi 0, %s157
    %s160 = sphi 0, %s159
    %s174 = sphi 0, %s160
    %s178 = sphi 0, %s178
    %s180 = sphi 0, %s178
    %s181 = sphi 0, %s180
    %s195 = sphi 0, %s181
    %s203 = sphi 0, %s205
    %s206 = sphi 0, %s203
    %s207 = sphi 0, %s206
    %s223 = sphi 0, %s207
  $region4: #{epfm_forward.1} parent=0 // loop_header_branch
    %16 = sbr.rel (%p14) target = $region8
  $region5: #{epfm_forward.1} parent=0 // loop_body
    %s18 = ssub.s32 %s13, 1
    %s19 = ssub.s32 %s13, 2
    %s26 = sadd.s32 1, %s21
    %p27 = scmp.ge.s32.totalorder %s26, 1
    %s28 = scalar_select %p27, 0, %s26
    %s29 = sadd.s32 1, %s20
    %s30 = scalar_select %p27, %s29, %s20
    %p31 = scmp.ge.s32.totalorder %s30, 2
    %s32 = scalar_select %p31, 0, %s30
    %s33 = ssub.s32 %s20, %s32
    %s34 = ssub.s32 %s21, %s28
    %s35 = sor.u32 %s33, %s34
    %p36 = scmp.eq.s32.totalorder %s35, 0
    %s38 = sadd.s32 %s37, 1
    %s39 = scalar_select %p36, %s37, %s38
    %p42 = pneg %p36
    %p43 = scmp.eq.s32.totalorder %s13, 1
    %p44 = por %p42, %p43
    %p45 = scmp.ne.s32.totalorder %s37, %s40
    %p46 = scmp.eq.s32.totalorder %s13, 0
    %p47 = por %p45, %p46
    %p48 = scmp.ne.s32.totalorder %s37, %s40
    %p49 = scmp.eq.s32.totalorder %s18, 1
    %p50 = por %p48, %p49
    %p51 = scmp.ne.s32.totalorder %s40, %s41
    %p52 = scmp.eq.s32.totalorder %s18, 0
    %p53 = por %p51, %p52
    %p54 = scmp.ne.s32.totalorder %s40, %s41
    %p55 = scmp.eq.s32.totalorder %s19, 1
    %p56 = por %p54, %p55
    %p58 = scmp.ne.s32.totalorder %s41, %s57
    %p59 = scmp.eq.s32.totalorder %s19, 0
    %p60 = por %p58, %p59
    %s61 = ssub.s32 %s20, %s32
    %s62 = ssub.s32 %s21, %s28
    %s63 = sor.u32 %s61, %s62
    %p64 = scmp.eq.s32.totalorder %s63, 0
    %s66 = sadd.s32 %s65, 1
    %s67 = scalar_select %p64, %s65, %s66
    %p70 = pneg %p64
    %p71 = scmp.eq.s32.totalorder %s13, 1
    %p72 = por %p70, %p71
    %p73 = scmp.ne.s32.totalorder %s65, %s68
    %p74 = scmp.eq.s32.totalorder %s13, 0
    %p75 = por %p73, %p74
    %p76 = scmp.ne.s32.totalorder %s65, %s68
    %p77 = scmp.eq.s32.totalorder %s18, 1
    %p78 = por %p76, %p77
    %p79 = scmp.ne.s32.totalorder %s68, %s69
    %p80 = scmp.eq.s32.totalorder %s18, 0
    %p81 = por %p79, %p80
    %p82 = scmp.ne.s32.totalorder %s68, %s69
    %p83 = scmp.eq.s32.totalorder %s19, 1
    %p84 = por %p82, %p83
    %p86 = scmp.ne.s32.totalorder %s69, %s85
    %p87 = scmp.eq.s32.totalorder %s19, 0
    %p88 = por %p86, %p87
    %s89 = ssub.s32 %s20, %s32
    %p90 = scmp.eq.s32.totalorder %s89, 0
    %s92 = sadd.s32 %s91, 1
    %s93 = scalar_select %p90, %s91, %s92
    %p96 = pneg %p90
    %p97 = scmp.eq.s32.totalorder %s13, 1
    %p98 = por %p96, %p97
    %p99 = scmp.ne.s32.totalorder %s91, %s94
    %p100 = scmp.eq.s32.totalorder %s13, 0
    %p101 = por %p99, %p100
    %p102 = scmp.ne.s32.totalorder %s91, %s94
    %p103 = scmp.eq.s32.totalorder %s18, 1
    %p104 = por %p102, %p103
    %p105 = scmp.ne.s32.totalorder %s94, %s95
    %p106 = scmp.eq.s32.totalorder %s18, 0
    %p107 = por %p105, %p106
    %p108 = scmp.ne.s32.totalorder %s94, %s95
    %p109 = scmp.eq.s32.totalorder %s19, 1
    %p110 = por %p108, %p109
    %p112 = scmp.ne.s32.totalorder %s95, %s111
    %p113 = scmp.eq.s32.totalorder %s19, 0
    %p114 = por %p112, %p113
    %s116 = sadd.s32 %s115, 1
    %p119 = scmp.eq.s32.totalorder %s13, 1
    %p120 = scmp.ne.s32.totalorder %s115, %s117
    %p121 = scmp.eq.s32.totalorder %s13, 0
    %p122 = por %p120, %p121
    %p123 = scmp.ne.s32.totalorder %s115, %s117
    %p124 = scmp.eq.s32.totalorder %s18, 1
    %p125 = por %p123, %p124
    %p126 = scmp.ne.s32.totalorder %s117, %s118
    %p127 = scmp.eq.s32.totalorder %s18, 0
    %p128 = por %p126, %p127
    %p129 = scmp.ne.s32.totalorder %s117, %s118
    %p130 = scmp.eq.s32.totalorder %s19, 1
    %p131 = por %p129, %p130
    %p133 = scmp.ne.s32.totalorder %s118, %s132
    %p134 = scmp.eq.s32.totalorder %s19, 0
    %p135 = por %p133, %p134
    %s137 = sadd.s32 %s136, 1
    %p140 = scmp.eq.s32.totalorder %s13, 1
    %p141 = scmp.ne.s32.totalorder %s136, %s138
    %p142 = scmp.eq.s32.totalorder %s13, 0
    %p143 = por %p141, %p142
    %p144 = scmp.ne.s32.totalorder %s136, %s138
    %p145 = scmp.eq.s32.totalorder %s18, 1
    %p146 = por %p144, %p145
    %p147 = scmp.ne.s32.totalorder %s138, %s139
    %p148 = scmp.eq.s32.totalorder %s18, 0
    %p149 = por %p147, %p148
    %p150 = scmp.ne.s32.totalorder %s138, %s139
    %p151 = scmp.eq.s32.totalorder %s19, 1
    %p152 = por %p150, %p151
    %p154 = scmp.ne.s32.totalorder %s139, %s153
    %p155 = scmp.eq.s32.totalorder %s19, 0
    %p156 = por %p154, %p155
    %s158 = sadd.s32 %s157, 1
    %p161 = scmp.eq.s32.totalorder %s13, 1
    %p162 = scmp.ne.s32.totalorder %s157, %s159
    %p163 = scmp.eq.s32.totalorder %s13, 0
    %p164 = por %p162, %p163
    %p165 = scmp.ne.s32.totalorder %s157, %s159
    %p166 = scmp.eq.s32.totalorder %s18, 1
    %p167 = por %p165, %p166
    %p168 = scmp.ne.s32.totalorder %s159, %s160
    %p169 = scmp.eq.s32.totalorder %s18, 0
    %p170 = por %p168, %p169
    %p171 = scmp.ne.s32.totalorder %s159, %s160
    %p172 = scmp.eq.s32.totalorder %s19, 1
    %p173 = por %p171, %p172
    %p175 = scmp.ne.s32.totalorder %s160, %s174
    %p176 = scmp.eq.s32.totalorder %s19, 0
    %p177 = por %p175, %p176
    %s179 = sadd.s32 %s178, 1
    %p182 = scmp.eq.s32.totalorder %s13, 1
    %p183 = scmp.ne.s32.totalorder %s178, %s180
    %p184 = scmp.eq.s32.totalorder %s13, 0
    %p185 = por %p183, %p184
    %p186 = scmp.ne.s32.totalorder %s178, %s180
    %p187 = scmp.eq.s32.totalorder %s18, 1
    %p188 = por %p186, %p187
    %p189 = scmp.ne.s32.totalorder %s180, %s181
    %p190 = scmp.eq.s32.totalorder %s18, 0
    %p191 = por %p189, %p190
    %p192 = scmp.ne.s32.totalorder %s180, %s181
    %p193 = scmp.eq.s32.totalorder %s19, 1
    %p194 = por %p192, %p193
    %p196 = scmp.ne.s32.totalorder %s181, %s195
    %p197 = scmp.eq.s32.totalorder %s19, 0
    %p198 = por %p196, %p197
    %s199 = ssub.s32 %s20, %s32
    %s200 = ssub.s32 %s21, %s28
    %s201 = sor.u32 %s199, %s200
    %p202 = scmp.eq.s32.totalorder %s201, 0
    %s204 = sadd.s32 %s203, 1
    %s205 = scalar_select %p202, %s203, %s204
    %p208 = pneg %p202
    %p209 = scmp.eq.s32.totalorder %s13, 1
    %p210 = por %p208, %p209
    %p211 = scmp.ne.s32.totalorder %s203, %s206
    %p212 = scmp.eq.s32.totalorder %s13, 0
    %p213 = por %p211, %p212
    %p214 = scmp.ne.s32.totalorder %s203, %s206
    %p215 = scmp.eq.s32.totalorder %s18, 1
    %p216 = por %p214, %p215
    %p217 = scmp.ne.s32.totalorder %s206, %s207
    %p218 = scmp.eq.s32.totalorder %s18, 0
    %p219 = por %p217, %p218
    %p220 = scmp.ne.s32.totalorder %s206, %s207
    %p221 = scmp.eq.s32.totalorder %s19, 1
    %p222 = por %p220, %p221
    %p224 = scmp.ne.s32.totalorder %s207, %s223
    %p225 = scmp.eq.s32.totalorder %s19, 0
    %p226 = por %p224, %p225
    %p227 = scmp.le.s32.totalorder 1, %s13
    %p228 = scmp.lt.s32.totalorder %s13, 3
    %p229 = pnand %p227, %p228
    %p230 = pneg %p229
    // Predicated region
    $region9: #{epfm_forward.1} parent=5 // pred_check
      _
    $region10: #{epfm_forward.1} parent=5 // pred_check_branch
      %232 = sbr.rel (%p229) target = $region12
    $region11: #{epfm_forward.1} parent=5 // pred_region
      %s233 = ssub.s32 %s13, 1
      // Predicated region
      $region13: #{epfm_forward.1} parent=11 // pred_check
        %p234 = pneg %p128
      $region14: #{epfm_forward.1} parent=11 // pred_check_branch
        %236 = sbr.rel (%p234) target = $region16
      $region15: #{epfm_forward.1} parent=11 // pred_region
        _
      $region16: #{epfm_forward.1} parent=11 // pred_fallthru
        _
      // Predicated region
      $region17: #{epfm_forward.1} parent=11 // pred_check
        %p237 = pneg %p149
      $region18: #{epfm_forward.1} parent=11 // pred_check_branch
        %239 = sbr.rel (%p237) target = $region20
      $region19: #{epfm_forward.1} parent=11 // pred_region
        _
      $region20: #{epfm_forward.1} parent=11 // pred_fallthru
        _
      // Predicated region
      $region21: #{epfm_forward.1} parent=11 // pred_check
        %p240 = pneg %p170
      $region22: #{epfm_forward.1} parent=11 // pred_check_branch
        %242 = sbr.rel (%p240) target = $region24
      $region23: #{epfm_forward.1} parent=11 // pred_region
        _
      $region24: #{epfm_forward.1} parent=11 // pred_fallthru
        _
      // Predicated region
      $region25: #{epfm_forward.1} parent=11 // pred_check
        %p243 = pneg %p191
      $region26: #{epfm_forward.1} parent=11 // pred_check_branch
        %245 = sbr.rel (%p243) target = $region28
      $region27: #{epfm_forward.1} parent=11 // pred_region
        _
      $region28: #{epfm_forward.1} parent=11 // pred_fallthru
        _
    $region12: #{epfm_forward.1} parent=5 // pred_fallthru
      _
    %p246 = scmp.lt.s32.totalorder %s13, 2
    // Predicated region
    $region29: #{epfm_forward.1} parent=5 // pred_check
      %p247 = pneg %p246
    $region30: #{epfm_forward.1} parent=5 // pred_check_branch
      %249 = sbr.rel (%p247) target = $region32
    $region31: #{epfm_forward.1} parent=5 // pred_region
      // Predicated region
      $region33: #{epfm_forward.1} parent=31 // pred_check
        %p250 = pneg %p47
      $region34: #{epfm_forward.1} parent=31 // pred_check_branch
        %252 = sbr.rel (%p250) target = $region36
      $region35: #{epfm_forward.1} parent=31 // pred_region
        %s253 = smul.u32 2, %s21
        %p254 = scmp.lt.s32.totalorder %s20, 1
        %s255 = scalar_select %p254, %s20, 1
        %p256 = scmp.lt.s32.totalorder %s253, 1
        %s257 = scalar_select %p256, %s253, 1
        %s258 = smul.addr %s255, 2
        %s259 = sadd.s32 %s257, %s258
        %s260 = smul.addr %s259, 4
        %s261 = scalar_lea.vmem %s0, %s260
        %s262 = smul.u32 2, %s21
      $region36: #{epfm_forward.1} parent=31 // pred_fallthru
        _
      // Predicated region
      $region37: #{epfm_forward.1} parent=31 // pred_check
        %p263 = pneg %p75
      $region38: #{epfm_forward.1} parent=31 // pred_check_branch
        %265 = sbr.rel (%p263) target = $region40
      $region39: #{epfm_forward.1} parent=31 // pred_region
        %s266 = smul.u32 2, %s21
        %p267 = scmp.lt.s32.totalorder %s20, 1
        %s268 = scalar_select %p267, %s20, 1
        %p269 = scmp.lt.s32.totalorder %s266, 1
        %s270 = scalar_select %p269, %s266, 1
        %s271 = smul.addr %s268, 2
        %s272 = sadd.s32 %s270, %s271
        %s273 = smul.addr %s272, 2
        %s274 = scalar_lea.vmem %s1, %s273
        %s275 = smul.u32 2, %s21
      $region40: #{epfm_forward.1} parent=31 // pred_fallthru
        _
      // Predicated region
      $region41: #{epfm_forward.1} parent=31 // pred_check
        %p276 = pneg %p101
      $region42: #{epfm_forward.1} parent=31 // pred_check_branch
        %278 = sbr.rel (%p276) target = $region44
      $region43: #{epfm_forward.1} parent=31 // pred_region
        %p279 = scmp.lt.s32.totalorder %s20, 1
        %s280 = scalar_select %p279, %s20, 1
        %s281 = smul.addr %s280, 4
        %s282 = scalar_lea.vmem %s2, %s281
      $region44: #{epfm_forward.1} parent=31 // pred_fallthru
        _
    $region32: #{epfm_forward.1} parent=5 // pred_fallthru
      _
    %p283 = scmp.le.s32.totalorder 1, %s13
    %p284 = scmp.lt.s32.totalorder %s13, 3
    %p285 = pnand %p283, %p284
    %p286 = pneg %p285
    // Predicated region
    $region45: #{epfm_forward.1} parent=5 // pred_check
      _
    $region46: #{epfm_forward.1} parent=5 // pred_check_branch
      %288 = sbr.rel (%p285) target = $region48
    $region47: #{epfm_forward.1} parent=5 // pred_region
      %s289 = ssub.s32 %s13, 1
      %s290 = smul.u32 2, %s23
      %p291 = scmp.lt.s32.totalorder %s22, 1
      %s292 = scalar_select %p291, %s22, 1
      %p293 = scmp.lt.s32.totalorder %s290, 1
      %s294 = scalar_select %p293, %s290, 1
      %s295 = smul.addr %s292, 2
      %s296 = sadd.s32 %s294, %s295
      %s297 = smul.addr %s296, 4
      %s298 = scalar_lea.vmem %s0, %s297
      %p299 = pneg %p53
      %p300 = pneg %p50
      %s301 = smul.u32 2, %s23
      %p302 = scmp.lt.s32.totalorder %s22, 1
      %s303 = scalar_select %p302, %s22, 1
      %p304 = scmp.lt.s32.totalorder %s301, 1
      %s305 = scalar_select %p304, %s301, 1
      %s306 = smul.addr %s303, 2
      %s307 = sadd.s32 %s305, %s306
      %s308 = smul.addr %s307, 2
      %s309 = scalar_lea.vmem %s1, %s308
      %p310 = pneg %p81
      %p311 = pneg %p78
      %p312 = scmp.lt.s32.totalorder %s22, 1
      %s313 = scalar_select %p312, %s22, 1
      %s314 = smul.addr %s313, 4
      %s315 = scalar_lea.vmem %s2, %s314
      %p316 = pneg %p107
      %p317 = pneg %p104
      %p318 = pneg %p128
      %p319 = pneg %p125
      %p320 = pneg %p149
      %p321 = pneg %p146
      %p322 = pneg %p170
      %p323 = pneg %p167
      %p324 = pneg %p191
      %p325 = pneg %p188
      %p326 = pneg %p219
      %p327 = pneg %p216
      %s328 = smul.u32 2, %s23
      %p329 = scmp.lt.s32.totalorder %s22, 1
      %s330 = scalar_select %p329, %s22, 1
      %p331 = scmp.lt.s32.totalorder %s328, 1
      %s332 = scalar_select %p331, %s328, 1
      %s333 = smul.addr %s330, 2
      %s334 = sadd.s32 %s332, %s333
      %s335 = smul.addr %s334, 4
      %s336 = scalar_lea.vmem %s7, %s335
      %s337 = smul.u32 2, %s23
      %p338 = scmp.lt.s32.totalorder %s22, 1
      %s339 = scalar_select %p338, %s22, 1
      %p340 = scmp.lt.s32.totalorder %s337, 1
      %s341 = scalar_select %p340, %s337, 1
      %s342 = smul.addr %s339, 2
      %s343 = sadd.s32 %s341, %s342
      %s344 = smul.addr %s343, 4
      %s345 = scalar_lea.vmem %s0, %s344
      %s346 = smul.u32 2, %s23
      %s347 = smul.u32 2, %s23
      %p348 = scmp.lt.s32.totalorder %s22, 1
      %s349 = scalar_select %p348, %s22, 1
      %p350 = scmp.lt.s32.totalorder %s347, 1
      %s351 = scalar_select %p350, %s347, 1
      %s352 = smul.addr %s349, 2
      %s353 = sadd.s32 %s351, %s352
      %s354 = smul.addr %s353, 2
      %s355 = scalar_lea.vmem %s1, %s354
      %s356 = smul.u32 2, %s23
      %p357 = scmp.lt.s32.totalorder %s22, 1
      %s358 = scalar_select %p357, %s22, 1
      %s359 = smul.addr %s358, 4
      %s360 = scalar_lea.vmem %s2, %s359
      %s361 = smul.u32 2, %s23
      %p362 = scmp.lt.s32.totalorder %s22, 1
      %s363 = scalar_select %p362, %s22, 1
      %p364 = scmp.lt.s32.totalorder %s361, 1
      %s365 = scalar_select %p364, %s361, 1
      %s366 = smul.addr %s363, 2
      %s367 = sadd.s32 %s365, %s366
      %s368 = smul.addr %s367, 4
      %s369 = scalar_lea.vmem %s7, %s368
      %s370 = smul.u32 2, %s23
      %v371 = vld [vmem:[%s345] sm:$0xff]
      %v372 = vld [vmem:[%s355] sm:$0xf]
      %v373 = vunpack.c.l.bf16 %v372
      %v374 = vld [vmem:[%s360] sm:$0xf]
      %v375 = vmul.f32 %v371, 3.0
      %v376 = vsub.f32 %v375, %v373
      %378 = vset.pattern.permute.xlu0 0
      %379 = vperm.xlu0 %378, %v374
      %v380 = vpop.permute.xlu0 %379
      %v382 = vunpack.c.l.s4 839922192
      %v383 = vunpack.c.0.s8 %v382
      %v384 = vlaneseq
      %v385 = vshrl.u32 %v384, 7
      %v386 = vsub.s32 %v383, %v385
      %v387 = vrot.slane %v380, %v386
      %v389 = vmul.f32 %v371, %v387
      %v391 = vcombine.high %v376, %v376
      %v394 = vcombine.low %v389, %v389
      %vm396 = vcmask 1043456
      %v397 = vsel %vm396, %v376, %v394
      %v398 = vsel %vm396, %v391, %v389
      %v399 = vld [vmem:[%s3] sm:$0xff]
      %v400 = vld [vmem:[%s4] sm:$0xff]
      %402 = vset.pattern.permute.xlu0 0
      %403 = vperm.xlu0 %402, %v400
      %v404 = vpop.permute.xlu0 %403
      %vm406 = vcmask 64512
      %v408 = vsel %vm406, %v399, 0
      %410 = vmatprep.subr.mxu0 %v398
      %411 = vmatpush1.msra.mxu0 %v397
      %412 = vmatprep.subr.mxu0 0.0
      %413 = vmatpush1.msra.mxu0 0.0
      %414 = vmatprep.subr.mxu0 0.0
      %415 = vmatpush1.msra.mxu0 0.0
      %416 = vmatprep.subr.mxu0 0.0
      %417 = vmatpush1.msra.mxu0 0.0
      %418 = vmatprep.subr.mxu0 0.0
      %419 = vmatpush1.msra.mxu0 0.0
      %420 = vmatprep.subr.mxu0 0.0
      %421 = vmatpush1.msra.mxu0 0.0
      %422 = vmatprep.subr.mxu0 0.0
      %423 = vmatpush1.msra.mxu0 0.0
      %424 = vmatprep.subr.mxu0 0.0
      %425 = vmatpush1.msra.mxu0 0.0
      %426 = vmatprep.subr.mxu0 0.0
      %427 = vmatpush1.msra.mxu0 0.0
      %428 = vmatprep.subr.mxu0 0.0
      %429 = vmatpush1.msra.mxu0 0.0
      %430 = vmatprep.subr.mxu0 0.0
      %431 = vmatpush1.msra.mxu0 0.0
      %432 = vmatprep.subr.mxu0 0.0
      %433 = vmatpush1.msra.mxu0 0.0
      %434 = vmatprep.subr.mxu0 0.0
      %435 = vmatpush1.msra.mxu0 0.0
      %436 = vmatprep.subr.mxu0 0.0
      %437 = vmatpush1.msra.mxu0 0.0
      %438 = vmatprep.subr.mxu0 0.0
      %439 = vmatpush1.msra.mxu0 0.0
      %440 = vmatprep.subr.mxu0 0.0
      %441 = vmatpush1.msra.mxu0 0.0
      %442 = vmatprep.subr.mxu0 0.0
      %443 = vmatpush1.msra.mxu0 0.0
      %444 = vmatprep.subr.mxu0 0.0
      %445 = vmatpush1.msra.mxu0 0.0
      %446 = vmatprep.subr.mxu0 0.0
      %447 = vmatpush1.msra.mxu0 0.0
      %448 = vmatprep.subr.mxu0 0.0
      %449 = vmatpush1.msra.mxu0 0.0
      %450 = vmatprep.subr.mxu0 0.0
      %451 = vmatpush1.msra.mxu0 0.0
      %452 = vmatprep.subr.mxu0 0.0
      %453 = vmatpush1.msra.mxu0 0.0
      %454 = vmatprep.subr.mxu0 0.0
      %455 = vmatpush1.msra.mxu0 0.0
      %456 = vmatprep.subr.mxu0 0.0
      %457 = vmatpush1.msra.mxu0 0.0
      %458 = vmatprep.subr.mxu0 0.0
      %459 = vmatpush1.msra.mxu0 0.0
      %460 = vmatprep.subr.mxu0 0.0
      %461 = vmatpush1.msra.mxu0 0.0
      %462 = vmatprep.subr.mxu0 0.0
      %463 = vmatpush1.msra.mxu0 0.0
      %464 = vmatprep.subr.mxu0 0.0
      %465 = vmatpush1.msra.mxu0 0.0
      %466 = vmatprep.subr.mxu0 0.0
      %467 = vmatpush1.msra.mxu0 0.0
      %468 = vmatprep.subr.mxu0 0.0
      %469 = vmatpush1.msra.mxu0 0.0
      %470 = vmatprep.subr.mxu0 0.0
      %471 = vmatpush1.msra.mxu0 0.0
      %472 = vmatprep.subr.mxu0 0.0
      %473 = vmatpush1.msra.mxu0 0.0
      %474 = vmatprep.mubr.f32.mxu0 0.0
      %475 = vmatmul.mubr.f32.gmra.mrb[0].mxu0 %v408
      %v476 = vpop.f32.mrb[0].mxu0
      %v477 = vadd.f32 %v404, %v476
      %v478 = vpop.f32.mrb[0].mxu0
      %v479 = vadd.f32 %v404, %v478
      %480 = vdwg.mxu0
      %v481 = vmul.f32 %v477, 0.5
      %v482 = vmul.f32 %v479, 0.5
      %v483 = vmul.f32 %v477, 0.70710677
      %v484 = vmul.f32 %v479, 0.70710677
      %v485 = vand.u32 2147483647, %v483
      %v486 = vand.u32 2147483647, %v484
      %v487 = vmul.f32 %v485, 0.3275911
      %v488 = vmul.f32 %v486, 0.3275911
      %v489 = vadd.f32 %v487, 1.0
      %v490 = vadd.f32 %v488, 1.0
      %v491 = vrcp.pop %v489
      %v492 = vmul.f32 1.0, %v491
      %v493 = vrcp.pop %v490
      %v494 = vmul.f32 1.0, %v493
      %v495 = vmul.f32 %v492, 1.0614054
      %v496 = vmul.f32 %v494, 1.0614054
      %v497 = vadd.f32 %v495, -1.4531521
      %v498 = vadd.f32 %v496, -1.4531521
      %v499 = vmul.f32 %v497, %v492
      %v500 = vmul.f32 %v498, %v494
      %v501 = vadd.f32 %v499, 1.4214138
      %v502 = vadd.f32 %v500, 1.4214138
      %v503 = vmul.f32 %v501, %v492
      %v504 = vmul.f32 %v502, %v494
      %v505 = vadd.f32 %v503, -0.28449672
      %v506 = vadd.f32 %v504, -0.28449672
      %v507 = vmul.f32 %v505, %v492
      %v508 = vmul.f32 %v506, %v494
      %v509 = vadd.f32 %v507, 0.2548296
      %v510 = vadd.f32 %v508, 0.2548296
      %v511 = vmul.f32 %v509, %v492
      %v512 = vmul.f32 %v510, %v494
      %v513 = vmul.f32 %v485, %v485
      %v514 = vmul.f32 %v486, %v486
      %v515 = vsub.f32 0.0, %v513
      %v516 = vsub.f32 0.0, %v514
      %v517 = vmul.f32 %v515, 1.442695
      %v518 = vpow.pop %v517
      %v519 = vmul.f32 %v516, 1.442695
      %v520 = vpow.pop %v519
      %v521 = vmul.f32 %v511, %v518
      %v522 = vmul.f32 %v512, %v520
      %v523 = vsub.f32 1.0, %v521
      %v524 = vsub.f32 1.0, %v522
      %vm525 = vcmp.ge.f32.partialorder %v483, 0.0
      %vm526 = vcmp.ge.f32.partialorder %v484, 0.0
      %v527 = vsub.f32 0.0, %v523
      %v528 = vsub.f32 0.0, %v524
      %v529 = vsel %vm525, %v523, %v527
      %v530 = vsel %vm526, %v524, %v528
      %v531 = vadd.f32 %v529, 1.0
      %v532 = vadd.f32 %v530, 1.0
      %v533 = vmul.f32 %v481, %v531
      %v534 = vmul.f32 %v482, %v532
      %v535 = vld [vmem:[%s5] sm:$0xff]
      %v536 = vld [vmem:[%s6] sm:$0xff]
      %538 = vset.pattern.permute.xlu0 0
      %539 = vperm.xlu0 %538, %v536
      %v540 = vpop.permute.xlu0 %539
      %v543 = vsel %vm406, %v535, 0
      %545 = vmatprep.subr.mxu0 %v534
      %546 = vmatpush1.msra.mxu0 %v533
      %547 = vmatprep.subr.mxu0 0.0
      %548 = vmatpush1.msra.mxu0 0.0
      %549 = vmatprep.subr.mxu0 0.0
      %550 = vmatpush1.msra.mxu0 0.0
      %551 = vmatprep.subr.mxu0 0.0
      %552 = vmatpush1.msra.mxu0 0.0
      %553 = vmatprep.subr.mxu0 0.0
      %554 = vmatpush1.msra.mxu0 0.0
      %555 = vmatprep.subr.mxu0 0.0
      %556 = vmatpush1.msra.mxu0 0.0
      %557 = vmatprep.subr.mxu0 0.0
      %558 = vmatpush1.msra.mxu0 0.0
      %559 = vmatprep.subr.mxu0 0.0
      %560 = vmatpush1.msra.mxu0 0.0
      %561 = vmatprep.subr.mxu0 0.0
      %562 = vmatpush1.msra.mxu0 0.0
      %563 = vmatprep.subr.mxu0 0.0
      %564 = vmatpush1.msra.mxu0 0.0
      %565 = vmatprep.subr.mxu0 0.0
      %566 = vmatpush1.msra.mxu0 0.0
      %567 = vmatprep.subr.mxu0 0.0
      %568 = vmatpush1.msra.mxu0 0.0
      %569 = vmatprep.subr.mxu0 0.0
      %570 = vmatpush1.msra.mxu0 0.0
      %571 = vmatprep.subr.mxu0 0.0
      %572 = vmatpush1.msra.mxu0 0.0
      %573 = vmatprep.subr.mxu0 0.0
      %574 = vmatpush1.msra.mxu0 0.0
      %575 = vmatprep.subr.mxu0 0.0
      %576 = vmatpush1.msra.mxu0 0.0
      %577 = vmatprep.subr.mxu0 0.0
      %578 = vmatpush1.msra.mxu0 0.0
      %579 = vmatprep.subr.mxu0 0.0
      %580 = vmatpush1.msra.mxu0 0.0
      %581 = vmatprep.subr.mxu0 0.0
      %582 = vmatpush1.msra.mxu0 0.0
      %583 = vmatprep.subr.mxu0 0.0
      %584 = vmatpush1.msra.mxu0 0.0
      %585 = vmatprep.subr.mxu0 0.0
      %586 = vmatpush1.msra.mxu0 0.0
      %587 = vmatprep.subr.mxu0 0.0
      %588 = vmatpush1.msra.mxu0 0.0
      %589 = vmatprep.subr.mxu0 0.0
      %590 = vmatpush1.msra.mxu0 0.0
      %591 = vmatprep.subr.mxu0 0.0
      %592 = vmatpush1.msra.mxu0 0.0
      %593 = vmatprep.subr.mxu0 0.0
      %594 = vmatpush1.msra.mxu0 0.0
      %595 = vmatprep.subr.mxu0 0.0
      %596 = vmatpush1.msra.mxu0 0.0
      %597 = vmatprep.subr.mxu0 0.0
      %598 = vmatpush1.msra.mxu0 0.0
      %599 = vmatprep.subr.mxu0 0.0
      %600 = vmatpush1.msra.mxu0 0.0
      %601 = vmatprep.subr.mxu0 0.0
      %602 = vmatpush1.msra.mxu0 0.0
      %603 = vmatprep.subr.mxu0 0.0
      %604 = vmatpush1.msra.mxu0 0.0
      %605 = vmatprep.subr.mxu0 0.0
      %606 = vmatpush1.msra.mxu0 0.0
      %607 = vmatprep.subr.mxu0 0.0
      %608 = vmatpush1.msra.mxu0 0.0
      %609 = vmatprep.mubr.f32.mxu0 0.0
      %610 = vmatmul.mubr.f32.gmra.mrb[0].mxu0 %v543
      %v611 = vpop.f32.mrb[0].mxu0
      %v612 = vadd.f32 %v540, %v611
      %v613 = vpop.f32.mrb[0].mxu0
      %v614 = vadd.f32 %v540, %v613
      %615 = vdwg.mxu0
      %v616 = vpack.c.bf16 %v612, %v612
      %v617 = vpack.c.bf16 %v614, %v614
      %v620 = vunpack.c.l.b16 %v616
      %v621 = vunpack.c.l.b16 %v617
      %v622 = vpack.c.b16 %v621, %v620
      %624 = vst [vmem:[%s369] sm:$0xff] %v622
      %s625 = smul.u32 2, %s23
      %p626 = scmp.lt.s32.totalorder %s22, 1
      %s627 = scalar_select %p626, %s22, 1
      %p628 = scmp.lt.s32.totalorder %s625, 1
      %s629 = scalar_select %p628, %s625, 1
      %s630 = smul.addr %s627, 2
      %s631 = sadd.s32 %s629, %s630
      %s632 = smul.addr %s631, 4
      %s633 = scalar_lea.vmem %s7, %s632
      // Predicated region
      $region49: #{epfm_forward.1} parent=47 // pred_check
        %p634 = pneg %p216
      $region50: #{epfm_forward.1} parent=47 // pred_check_branch
        %636 = sbr.rel (%p634) target = $region52
      $region51: #{epfm_forward.1} parent=47 // pred_region
        %s637 = smul.u32 2, %s23
      $region52: #{epfm_forward.1} parent=47 // pred_fallthru
        _
    $region48: #{epfm_forward.1} parent=5 // pred_fallthru
      _
    %p638 = scmp.le.s32.totalorder 2, %s13
    // Predicated region
    $region53: #{epfm_forward.1} parent=5 // pred_check
      %p639 = pneg %p638
    $region54: #{epfm_forward.1} parent=5 // pred_check_branch
      %641 = sbr.rel (%p639) target = $region56
    $region55: #{epfm_forward.1} parent=5 // pred_region
      %s642 = ssub.s32 %s13, 2
      // Predicated region
      $region57: #{epfm_forward.1} parent=55 // pred_check
        %p643 = pneg %p222
      $region58: #{epfm_forward.1} parent=55 // pred_check_branch
        %645 = sbr.rel (%p643) target = $region60
      $region59: #{epfm_forward.1} parent=55 // pred_region
        %s646 = smul.u32 2, %s25
        %p647 = scmp.lt.s32.totalorder %s24, 1
        %s648 = scalar_select %p647, %s24, 1
        %p649 = scmp.lt.s32.totalorder %s646, 1
        %s650 = scalar_select %p649, %s646, 1
        %s651 = smul.addr %s648, 2
        %s652 = sadd.s32 %s650, %s651
        %s653 = smul.addr %s652, 4
        %s654 = scalar_lea.vmem %s7, %s653
      $region60: #{epfm_forward.1} parent=55 // pred_fallthru
        _
    $region56: #{epfm_forward.1} parent=5 // pred_fallthru
      _
  $region6: #{epfm_forward.1} parent=0 // loop_footer
    %s17 = sadd.s32 1, %s13
  $region7: #{epfm_forward.1} parent=0 // loop_footer_branch
    %12 = sbr.rel target = $region3
  $region8: #{epfm_forward.1} parent=0 // loop_exit
    _

</llo_original>
